<compile_context>
chip_gen: v7x
topology: tpu7x:2x2x1
jax: 0.10.0
libtpu: 0.0.40
codegen_flags: <defaults>
</compile_context>

<pallas_src>
import jax
import jax.numpy as jnp
from jax.experimental import pallas as pl
from jax.experimental.pallas import tpu as pltpu


EPS = 1e-5


def linear_block_kernel(x_ref, w_ref, b_ref, g_ref, beta_ref, o_ref, acc_ref):
    """Grid = (j over F_out tiles [parallel], k over F_in tiles [arbitrary])."""
    k = pl.program_id(1)

    @pl.when(k == 0)
    def _():
        acc_ref[...] = jnp.zeros_like(acc_ref)

    # ---- Linear (MXU): bf16 operands, f32 accumulation. Weight tile is [tn, tk]
    #      (PyTorch layout); contract on dim 1 of both operands (transposed-B matmul).
    x_bf = x_ref[...].astype(jnp.bfloat16)
    w_bf = w_ref[...].astype(jnp.bfloat16)
    acc_ref[...] += jax.lax.dot_general(
        x_bf, w_bf,
        dimension_numbers=(((1,), (1,)), ((), ())),
        preferred_element_type=jnp.float32,
    )

    # ---- Epilogue (only once per output tile): bias + ReLU + BatchNorm (batch stats) ----
    @pl.when(k == pl.num_programs(1) - 1)
    def _():
        a = jnp.maximum(acc_ref[...] + b_ref[...], 0.0)          # (B, tn), f32
        n = a.shape[0]
        inv_n = 1.0 / n
        s1 = jnp.sum(a, axis=0, keepdims=True)                   # single-pass stats
        s2 = jnp.sum(a * a, axis=0, keepdims=True)
        mean = s1 * inv_n
        var = jnp.maximum(s2 * inv_n - mean * mean, 0.0)         # biased var, clamped >= 0
        inv_std = jax.lax.rsqrt(var + EPS)
        scale = g_ref[...] * inv_std                             # fold affine: 2 VPU ops/elem
        shift = beta_ref[...] - mean * scale
        o_ref[...] = (a * scale + shift).astype(o_ref.dtype)


def linear_block(x, weight, bias, gamma, beta, *, tn=128, tk=128):
    """x: [B, F_in]; weight: [F_out, F_in] (PyTorch layout); bias/gamma/beta: [F_out].

    tn/tk are multiples of 128 (lane width / v5e MXU). For large F_in on v6e/v7x, tk can be
    raised to 256–512; keep 2*(tn*tk*4) + B*tk*4 + 2*(B*tn*4) + B*tn*4 well under the scoped
    VMEM limit (32 MiB default on v7x).
    """
    B, F_in = x.shape
    F_out = weight.shape[0]

    # Pad feature axes to lane-dense multiples of the tile sizes (zeros are harmless:
    # padded features produce a == 0, gamma/beta padding == 0 -> output 0, then sliced off).
    F_in_p = ((F_in + tk - 1) // tk) * tk
    F_out_p = ((F_out + tn - 1) // tn) * tn
    if F_in_p != F_in:
        x = jnp.pad(x, ((0, 0), (0, F_in_p - F_in)))
        weight = jnp.pad(weight, ((0, 0), (0, F_in_p - F_in)))
    if F_out_p != F_out:
        weight = jnp.pad(weight, ((0, F_out_p - F_out), (0, 0)))
        bias = jnp.pad(bias, (0, F_out_p - F_out))
        gamma = jnp.pad(gamma, (0, F_out_p - F_out))
        beta = jnp.pad(beta, (0, F_out_p - F_out))

    b2 = bias.reshape(1, F_out_p)
    g2 = gamma.reshape(1, F_out_p)
    be2 = beta.reshape(1, F_out_p)

    grid = (F_out_p // tn, F_in_p // tk)

    out = pl.pallas_call(
        linear_block_kernel,
        out_shape=jax.ShapeDtypeStruct((B, F_out_p), jnp.float32),
        grid_spec=pltpu.PrefetchScalarGridSpec(
            num_scalar_prefetch=0,
            grid=grid,
            in_specs=[
                pl.BlockSpec((B, tk), lambda j, k: (0, k)),    # x: full batch, K tile
                pl.BlockSpec((tn, tk), lambda j, k: (j, k)),   # weight, PyTorch [F_out, F_in]
                pl.BlockSpec((1, tn), lambda j, k: (0, j)),    # bias
                pl.BlockSpec((1, tn), lambda j, k: (0, j)),    # gamma
                pl.BlockSpec((1, tn), lambda j, k: (0, j)),    # beta
            ],
            out_specs=pl.BlockSpec((B, tn), lambda j, k: (0, j)),
            scratch_shapes=[pltpu.VMEM((B, tn), jnp.float32)],  # f32 accumulator
        ),
        compiler_params=pltpu.CompilerParams(
            dimension_semantics=("parallel", "arbitrary"),      # feature tiles across cores
        ),
    )(x, weight, b2, g2, be2)

    return out[:, :F_out] if F_out_p != F_out else out
    # NOTE: batch stats are exact only because B is never tiled. If the batch axis ever
    # needs tiling (huge B), switch to a two-kernel stats-then-normalize structure.
    # TODO(synk): for the toy 8x32x32 shape this is launch-latency bound; the real win is
    # fusing several LinearBlocks into one pallas_call, not further tuning of this one.


def reference_f32(x, weight, bias, gamma, beta):
    """PyTorch-semantics reference in full f32."""
    y = x @ weight.T + bias
    a = jnp.maximum(y, 0.0)
    mean = jnp.mean(a, axis=0, keepdims=True)
    var = jnp.mean((a - mean) ** 2, axis=0, keepdims=True)
    return gamma * (a - mean) / jnp.sqrt(var + EPS) + beta


def reference_bf16_matmul(x, weight, bias, gamma, beta):
    """Same precision policy as the kernel (bf16 MXU operands, f32 accumulation/epilogue)."""
    y = jnp.dot(x.astype(jnp.bfloat16), weight.T.astype(jnp.bfloat16),
                preferred_element_type=jnp.float32) + bias
    a = jnp.maximum(y, 0.0)
    mean = jnp.mean(a, axis=0, keepdims=True)
    var = jnp.mean((a - mean) ** 2, axis=0, keepdims=True)
    return gamma * (a - mean) / jnp.sqrt(var + EPS) + beta


if __name__ == "__main__":
    key = jax.random.PRNGKey(0)
    B, F_in, F_out = 8, 32, 32

    k_x, k_w, k_b = jax.random.split(key, 3)
    x = jax.random.normal(k_x, (B, F_in), dtype=jnp.float32)

    # Deterministic parameter init (PyTorch-Linear-style uniform bounds).
    bound = 1.0 / (F_in ** 0.5)
    weight = jax.random.uniform(k_w, (F_out, F_in), jnp.float32, -bound, bound)
    bias = jax.random.uniform(k_b, (F_out,), jnp.float32, -bound, bound)
    gamma = jnp.ones((F_out,), jnp.float32)   # BatchNorm1d affine defaults
    beta = jnp.zeros((F_out,), jnp.float32)

    out = jax.block_until_ready(linear_block(x, weight, bias, gamma, beta))
    assert out.shape == (B, F_out)

    # Tight check vs. a reference using the kernel's precision policy.
    ref_b = reference_bf16_matmul(x, weight, bias, gamma, beta)
    assert jnp.allclose(out, ref_b, atol=2e-3, rtol=2e-3), float(jnp.max(jnp.abs(out - ref_b)))

    # Loose check vs. full-f32 (PyTorch-style) math: bf16 matmul operands cost ~O(1e-2).
    ref_f = reference_f32(x, weight, bias, gamma, beta)
    assert jnp.allclose(out, ref_f, atol=1e-1, rtol=1e-1), float(jnp.max(jnp.abs(out - ref_f)))

    print("KERNEL_OK")
</pallas_src>

<mosaic_0001>
module attributes {stable_mosaic.version = 11 : i64} {
  func.func @linear_block_kernel(%arg0: i32, %arg1: i32, %arg2: memref<8x128xf32, #tpu.memory_space<vmem>>, %arg3: memref<128x128xf32, #tpu.memory_space<vmem>>, %arg4: memref<1x128xf32, #tpu.memory_space<vmem>>, %arg5: memref<1x128xf32, #tpu.memory_space<vmem>>, %arg6: memref<1x128xf32, #tpu.memory_space<vmem>>, %arg7: memref<8x128xf32, #tpu.memory_space<vmem>>, %arg8: memref<8x128xf32, #tpu.memory_space<vmem>>) attributes {dimension_semantics = [#tpu.dimension_semantics<parallel>, #tpu.dimension_semantics<arbitrary>], iteration_bounds = array<i64: 1, 1>, scalar_prefetch = 0 : i64, scratch_operands = 1 : i64, tpu.core_type = #tpu.core_type<tc>, window_params = [{transform_indices = @transform_0, window_bounds = array<i64: 8, 128>}, {transform_indices = @transform_1, window_bounds = array<i64: 128, 128>}, {transform_indices = @transform_2, window_bounds = array<i64: 1, 128>}, {transform_indices = @transform_3, window_bounds = array<i64: 1, 128>}, {transform_indices = @transform_4, window_bounds = array<i64: 1, 128>}, {transform_indices = @transform_5, window_bounds = array<i64: 8, 128>}]} {
    %c0_i32 = arith.constant 0 : i32
    %0 = arith.cmpi eq, %arg1, %c0_i32 : i32
    %1 = arith.extui %0 : i1 to i32
    %c0_i32_0 = arith.constant 0 : i32
    %2 = arith.cmpi ne, %1, %c0_i32_0 : i32
    scf.if %2 {
      %cst_10 = arith.constant 0.000000e+00 : f32
      %14 = vector.broadcast %cst_10 : f32 to vector<8x128xf32>
      %c0_11 = arith.constant 0 : index
      %c0_12 = arith.constant 0 : index
      %15 = vector.load %arg8[%c0_11, %c0_12] : memref<8x128xf32, #tpu.memory_space<vmem>>, vector<8x128xf32>
      tpu.vector_store %arg8[%c0_11, %c0_12], %14 {strides = array<i32>} : memref<8x128xf32, #tpu.memory_space<vmem>>, vector<8x128xf32>,
    } else {
    }
    %c0 = arith.constant 0 : index
    %c0_1 = arith.constant 0 : index
    %3 = vector.load %arg2[%c0, %c0_1] : memref<8x128xf32, #tpu.memory_space<vmem>>, vector<8x128xf32>
    %4 = arith.truncf %3 : vector<8x128xf32> to vector<8x128xbf16>
    %c0_2 = arith.constant 0 : index
    %c0_3 = arith.constant 0 : index
    %5 = vector.load %arg3[%c0_2, %c0_3] : memref<128x128xf32, #tpu.memory_space<vmem>>, vector<128x128xf32>
    %6 = arith.truncf %5 : vector<128x128xf32> to vector<128x128xbf16>
    %c0_4 = arith.constant 0 : index
    %c0_5 = arith.constant 0 : index
    %7 = vector.load %arg8[%c0_4, %c0_5] : memref<8x128xf32, #tpu.memory_space<vmem>>, vector<8x128xf32>
    %cst = arith.constant dense<0.000000e+00> : vector<8x128xf32>
    %8 = tpu.matmul %4, %6, %cst {dimension_numbers = #tpu.dot_dimension_numbers<[1], [1], [0], [0], [0, 0, 1, 0], [], []>} : vector<8x128xbf16>, vector<128x128xbf16>, vector<8x128xf32> -> vector<8x128xf32>
    %9 = arith.addf %7, %8 : vector<8x128xf32>
    %c0_6 = arith.constant 0 : index
    %c0_7 = arith.constant 0 : index
    %10 = vector.load %arg8[%c0_6, %c0_7] : memref<8x128xf32, #tpu.memory_space<vmem>>, vector<8x128xf32>
    tpu.vector_store %arg8[%c0_6, %c0_7], %9 {strides = array<i32>} : memref<8x128xf32, #tpu.memory_space<vmem>>, vector<8x128xf32>,
    %c0_i32_8 = arith.constant 0 : i32
    %11 = arith.cmpi eq, %arg1, %c0_i32_8 : i32
    %12 = arith.extui %11 : i1 to i32
    %c0_i32_9 = arith.constant 0 : i32
    %13 = arith.cmpi ne, %12, %c0_i32_9 : i32
    scf.if %13 {
      %c0_10 = arith.constant 0 : index
      %c0_11 = arith.constant 0 : index
      %14 = vector.load %arg8[%c0_10, %c0_11] : memref<8x128xf32, #tpu.memory_space<vmem>>, vector<8x128xf32>
      %c0_12 = arith.constant 0 : index
      %c0_13 = arith.constant 0 : index
      %15 = vector.load %arg4[%c0_12, %c0_13] : memref<1x128xf32, #tpu.memory_space<vmem>>, vector<1x128xf32>
      %16 = vector.broadcast %15 : vector<1x128xf32> to vector<8x128xf32>
      %17 = arith.addf %14, %16 : vector<8x128xf32>
      %cst_14 = arith.constant 0.000000e+00 : f32
      %18 = vector.broadcast %cst_14 : f32 to vector<8x128xf32>
      %19 = arith.maximumf %17, %18 : vector<8x128xf32>
      %cst_15 = arith.constant dense<0.000000e+00> : vector<128xf32>
      %20 = vector.multi_reduction <add>, %19, %cst_15 [0] : vector<8x128xf32> to vector<128xf32>
      %21 = vector.shape_cast %20 : vector<128xf32> to vector<1x128xf32>
      %22 = arith.mulf %19, %19 : vector<8x128xf32>
      %cst_16 = arith.constant dense<0.000000e+00> : vector<128xf32>
      %23 = vector.multi_reduction <add>, %22, %cst_16 [0] : vector<8x128xf32> to vector<128xf32>
      %24 = vector.shape_cast %23 : vector<128xf32> to vector<1x128xf32>
      %cst_17 = arith.constant 1.250000e-01 : f32
      %25 = vector.broadcast %cst_17 : f32 to vector<1x128xf32>
      %26 = arith.mulf %21, %25 : vector<1x128xf32>
      %cst_18 = arith.constant 1.250000e-01 : f32
      %27 = vector.broadcast %cst_18 : f32 to vector<1x128xf32>
      %28 = arith.mulf %24, %27 : vector<1x128xf32>
      %29 = arith.mulf %26, %26 : vector<1x128xf32>
      %30 = arith.subf %28, %29 : vector<1x128xf32>
      %cst_19 = arith.constant 0.000000e+00 : f32
      %31 = vector.broadcast %cst_19 : f32 to vector<1x128xf32>
      %32 = arith.maximumf %30, %31 : vector<1x128xf32>
      %cst_20 = arith.constant 9.99999974E-6 : f32
      %33 = vector.broadcast %cst_20 : f32 to vector<1x128xf32>
      %34 = arith.addf %32, %33 : vector<1x128xf32>
      %35 = math.rsqrt %34 : vector<1x128xf32>
      %c0_21 = arith.constant 0 : index
      %c0_22 = arith.constant 0 : index
      %36 = vector.load %arg5[%c0_21, %c0_22] : memref<1x128xf32, #tpu.memory_space<vmem>>, vector<1x128xf32>
      %37 = arith.mulf %36, %35 : vector<1x128xf32>
      %c0_23 = arith.constant 0 : index
      %c0_24 = arith.constant 0 : index
      %38 = vector.load %arg6[%c0_23, %c0_24] : memref<1x128xf32, #tpu.memory_space<vmem>>, vector<1x128xf32>
      %39 = arith.mulf %26, %37 : vector<1x128xf32>
      %40 = arith.subf %38, %39 : vector<1x128xf32>
      %41 = vector.broadcast %37 : vector<1x128xf32> to vector<8x128xf32>
      %42 = arith.mulf %19, %41 : vector<8x128xf32>
      %43 = vector.broadcast %40 : vector<1x128xf32> to vector<8x128xf32>
      %44 = arith.addf %42, %43 : vector<8x128xf32>
      %c0_25 = arith.constant 0 : index
      %c0_26 = arith.constant 0 : index
      %45 = vector.load %arg7[%c0_25, %c0_26] : memref<8x128xf32, #tpu.memory_space<vmem>>, vector<8x128xf32>
      tpu.vector_store %arg7[%c0_25, %c0_26], %44 {strides = array<i32>} : memref<8x128xf32, #tpu.memory_space<vmem>>, vector<8x128xf32>,
    } else {
    }
    return
  }
  func.func @transform_0(%arg0: i32, %arg1: i32) -> (i32, i32) {
    %c0_i32 = arith.constant 0 : i32
    %c0_i32_0 = arith.constant 0 : i32
    return %c0_i32, %arg1 : i32, i32
  }
  func.func @transform_1(%arg0: i32, %arg1: i32) -> (i32, i32) {
    %c0_i32 = arith.constant 0 : i32
    return %arg0, %arg1 : i32, i32
  }
  func.func @transform_2(%arg0: i32, %arg1: i32) -> (i32, i32) {
    %c0_i32 = arith.constant 0 : i32
    %c0_i32_0 = arith.constant 0 : i32
    return %c0_i32, %arg0 : i32, i32
  }
  func.func @transform_3(%arg0: i32, %arg1: i32) -> (i32, i32) {
    %c0_i32 = arith.constant 0 : i32
    %c0_i32_0 = arith.constant 0 : i32
    return %c0_i32, %arg0 : i32, i32
  }
  func.func @transform_4(%arg0: i32, %arg1: i32) -> (i32, i32) {
    %c0_i32 = arith.constant 0 : i32
    %c0_i32_0 = arith.constant 0 : i32
    return %c0_i32, %arg0 : i32, i32
  }
  func.func @transform_5(%arg0: i32, %arg1: i32) -> (i32, i32) {
    %c0_i32 = arith.constant 0 : i32
    %c0_i32_0 = arith.constant 0 : i32
    return %c0_i32, %arg0 : i32, i32
  }
}

</mosaic_0001>

<llo_original>
// kernel: tpu_custom_call.1
$region0: #{tpu_custom_call.1}
  #allocation0 [shape = 'u32[]', space=smem, size = 0x4, offset = 0x4, fixed_abs, tag = 'smem constant byte address 0x4 - core index']
  #allocation1 [shape = 'u32[144,128]{1,0:T(1,128)}', space=vmem, size = 0x12000, scoped, tag = 'internal scratch']
  #allocation2 [shape = 'f32[8,128]{1,0:T(8,128)}', space=vmem, size = 0x1000, scoped, tag = 'scratch operand']
  %s0 = inlined_call_operand.hbm [shape: f32[8,128], index: 0, kind: input, shape index: {}]
  %s1 = inlined_call_operand.hbm [shape: f32[128,128], index: 1, kind: input, shape index: {}]
  %s2 = inlined_call_operand.vmem [shape: f32[1,128], index: 2, kind: input, shape index: {}]
  %s3 = inlined_call_operand.vmem [shape: f32[1,128], index: 3, kind: input, shape index: {}]
  %s4 = inlined_call_operand.vmem [shape: f32[1,128], index: 4, kind: input, shape index: {}]
  %s5 = inlined_call_operand.hbm [shape: f32[8,128], index: 5, kind: output, shape index: {}]
  %s6 = sld [smem:[#allocation0]]
  $region46: #{tpu_custom_call.1} parent=0
    _
  %s8 = ssub.s32 1, %s6
  %s9 = scalar_select 0, %s8, %s6
  $region1: #{tpu_custom_call.1} parent=0
    #allocation3 [shape = 'u8[4096]{0}', space=vmem, size = 0x1000, scoped, tag = 'input window, operand 0, single buffered']
    #allocation4 [shape = 's32[1]{0}', space=sflag, size = 0x4, scoped, tag = 'scoped memory for tpu_custom_call.1']
    #allocation5 [shape = 's32[1]{0}', space=sflag, size = 0x4, scoped, tag = 'scoped memory for tpu_custom_call.1']
    #allocation6 [shape = 'u8[65536]{0}', space=vmem, size = 0x10000, scoped, tag = 'input window, operand 1, single buffered']
    #allocation7 [shape = 's32[1]{0}', space=sflag, size = 0x4, scoped, tag = 'scoped memory for tpu_custom_call.1']
    #allocation8 [shape = 'u8[4096]{0}', space=vmem, size = 0x1000, scoped, tag = 'output window, operand 0, single buffered']
    %10 = vsyncpa [#allocation4], 0
    %11 = vsyncpa [#allocation7], 0
    %12 = vsyncpa [#allocation5], 0
    // Predicated region
    $region2: #{tpu_custom_call.1} parent=1 // pred_check
      _
    $region3: #{tpu_custom_call.1} parent=1 // pred_check_branch
      %14 = sbr.rel (0) target = $region5
    $region4: #{tpu_custom_call.1} parent=1 // pred_region
      %s16 = ssub.s32 128, 128
      %17 = vsyncadd [#allocation4], %s16
      %s19 = sshll.u32 [#allocation3], 4
      %s20 = int_to_ptr.vmem [resolvable:$true] %s19
      %22 = dma.hbm_to_vmem [thread:$0]  %s0, 128, %s20, [#allocation4]
    $region5: #{tpu_custom_call.1} parent=1 // pred_fallthru
      _
    // Predicated region
    $region6: #{tpu_custom_call.1} parent=1 // pred_check
      _
    $region7: #{tpu_custom_call.1} parent=1 // pred_check_branch
      %24 = sbr.rel (0) target = $region9
    $region8: #{tpu_custom_call.1} parent=1 // pred_region
      %s26 = ssub.s32 2048, 2048
      %27 = vsyncadd [#allocation7], %s26
      %s28 = sshll.u32 [#allocation6], 4
      %s29 = int_to_ptr.vmem [resolvable:$true] %s28
      %34 = dma.hbm_to_vmem [thread:$0]  %s1, 2048, %s29, [#allocation7], 128, 128, 8
    $region9: #{tpu_custom_call.1} parent=1 // pred_fallthru
      _
    // Predicated region
    $region10: #{tpu_custom_call.1} parent=1 // pred_check
      _
    $region11: #{tpu_custom_call.1} parent=1 // pred_check_branch
      %36 = sbr.rel (0) target = $region13
    $region12: #{tpu_custom_call.1} parent=1 // pred_region
      _
    $region13: #{tpu_custom_call.1} parent=1 // pred_fallthru
      _
    // Predicated region
    $region14: #{tpu_custom_call.1} parent=1 // pred_check
      _
    $region15: #{tpu_custom_call.1} parent=1 // pred_check_branch
      %38 = sbr.rel (0) target = $region17
    $region16: #{tpu_custom_call.1} parent=1 // pred_region
      _
    $region17: #{tpu_custom_call.1} parent=1 // pred_fallthru
      _
    // Predicated region
    $region18: #{tpu_custom_call.1} parent=1 // pred_check
      _
    $region19: #{tpu_custom_call.1} parent=1 // pred_check_branch
      %40 = sbr.rel (0) target = $region21
    $region20: #{tpu_custom_call.1} parent=1 // pred_region
      _
    $region21: #{tpu_custom_call.1} parent=1 // pred_fallthru
      _
    // Predicated region
    $region22: #{tpu_custom_call.1} parent=1 // pred_check
      _
    $region23: #{tpu_custom_call.1} parent=1 // pred_check_branch
      %42 = sbr.rel (0) target = $region25
    $region24: #{tpu_custom_call.1} parent=1 // pred_region
      %43 = dma.done [#allocation4], 128
    $region25: #{tpu_custom_call.1} parent=1 // pred_fallthru
      _
    // Predicated region
    $region26: #{tpu_custom_call.1} parent=1 // pred_check
      _
    $region27: #{tpu_custom_call.1} parent=1 // pred_check_branch
      %45 = sbr.rel (0) target = $region29
    $region28: #{tpu_custom_call.1} parent=1 // pred_region
      %46 = dma.done [#allocation7], 2048
    $region29: #{tpu_custom_call.1} parent=1 // pred_fallthru
      _
    %p48 = scmp.eq.s32.totalorder 0, 0
    // Predicated region
    $region30: #{tpu_custom_call.1} parent=1 // pred_check
      %p49 = pneg %p48
    $region31: #{tpu_custom_call.1} parent=1 // pred_check_branch
      %51 = sbr.rel (%p49) target = $region33
    $region32: #{tpu_custom_call.1} parent=1 // pred_region
      %52 = vst [vmem:[#allocation2] sm:$0xff] 0.0
    $region33: #{tpu_custom_call.1} parent=1 // pred_fallthru
      _
    %v53 = vld [vmem:[#allocation3] sm:$0xff]
    %v54 = vpack.c.bf16 %v53, %v53
    %v55 = vld [vmem:[#allocation6] sm:$0xff]
    %v56 = vld [vmem:[#allocation6 + $0x8] sm:$0xff]
    %v57 = vld [vmem:[#allocation6 + $0x10] sm:$0xff]
    %v58 = vld [vmem:[#allocation6 + $0x18] sm:$0xff]
    %v59 = vld [vmem:[#allocation6 + $0x20] sm:$0xff]
    %v60 = vld [vmem:[#allocation6 + $0x28] sm:$0xff]
    %v61 = vld [vmem:[#allocation6 + $0x30] sm:$0xff]
    %v62 = vld [vmem:[#allocation6 + $0x38] sm:$0xff]
    %v63 = vld [vmem:[#allocation6 + $0x40] sm:$0xff]
    %v64 = vld [vmem:[#allocation6 + $0x48] sm:$0xff]
    %v65 = vld [vmem:[#allocation6 + $0x50] sm:$0xff]
    %v66 = vld [vmem:[#allocation6 + $0x58] sm:$0xff]
    %v67 = vld [vmem:[#allocation6 + $0x60] sm:$0xff]
    %v68 = vld [vmem:[#allocation6 + $0x68] sm:$0xff]
    %v69 = vld [vmem:[#allocation6 + $0x70] sm:$0xff]
    %v70 = vld [vmem:[#allocation6 + $0x78] sm:$0xff]
    %v71 = vpack.c.bf16 %v56, %v55
    %v72 = vpack.c.bf16 %v58, %v57
    %v73 = vpack.c.bf16 %v60, %v59
    %v74 = vpack.c.bf16 %v62, %v61
    %v75 = vpack.c.bf16 %v64, %v63
    %v76 = vpack.c.bf16 %v66, %v65
    %v77 = vpack.c.bf16 %v68, %v67
    %v78 = vpack.c.bf16 %v70, %v69
    %v79 = vld [vmem:[#allocation2] sm:$0xff]
    %80 = vmatprep.subr.bf16.mxu0 0
    %81 = vmatpush1.bf16.xpose.msra.mxu0 %v71
    %82 = vmatprep.subr.bf16.mxu0 0
    %83 = vmatpush1.bf16.xpose.msra.mxu0 %v72
    %84 = vmatprep.subr.bf16.mxu0 0
    %85 = vmatpush1.bf16.xpose.msra.mxu0 %v73
    %86 = vmatprep.subr.bf16.mxu0 0
    %87 = vmatpush1.bf16.xpose.msra.mxu0 %v74
    %88 = vmatprep.subr.bf16.mxu0 0
    %89 = vmatpush1.bf16.xpose.msra.mxu0 %v75
    %90 = vmatprep.subr.bf16.mxu0 0
    %91 = vmatpush1.bf16.xpose.msra.mxu0 %v76
    %92 = vmatprep.subr.bf16.mxu0 0
    %93 = vmatpush1.bf16.xpose.msra.mxu0 %v77
    %94 = vmatprep.subr.bf16.mxu0 0
    %95 = vmatpush1.bf16.xpose.msra.mxu0 %v78
    %96 = vmatprep.subr.bf16.mxu0 0
    %97 = vmatpush1.bf16.xpose.msra.mxu0 0
    %98 = vmatprep.subr.bf16.mxu0 0
    %99 = vmatpush1.bf16.xpose.msra.mxu0 0
    %100 = vmatprep.subr.bf16.mxu0 0
    %101 = vmatpush1.bf16.xpose.msra.mxu0 0
    %102 = vmatprep.subr.bf16.mxu0 0
    %103 = vmatpush1.bf16.xpose.msra.mxu0 0
    %104 = vmatprep.subr.bf16.mxu0 0
    %105 = vmatpush1.bf16.xpose.msra.mxu0 0
    %106 = vmatprep.subr.bf16.mxu0 0
    %107 = vmatpush1.bf16.xpose.msra.mxu0 0
    %108 = vmatprep.subr.bf16.mxu0 0
    %109 = vmatpush1.bf16.xpose.msra.mxu0 0
    %110 = vmatprep.subr.bf16.mxu0 0
    %111 = vmatpush1.bf16.xpose.msra.mxu0 0
    %112 = vmatprep.mubr.bf16.mxu0 0
    %113 = vmatmul.mubr.bf16.gmra.mrb[0].mxu0 %v54
    %v114 = vpop.f32.mrb[0].mxu0
    %v115 = vadd.f32 0.0, %v114
    %v116 = vpop.f32.mrb[0].mxu0
    %v117 = vpop.f32.mrb[0].mxu0
    %v118 = vpop.f32.mrb[0].mxu0
    %119 = vdwg.mxu0
    %v120 = vadd.f32 %v79, %v115
    %121 = vst [vmem:[#allocation2] sm:$0xff] %v120
    // Predicated region
    $region34: #{tpu_custom_call.1} parent=1 // pred_check
      %p122 = pneg %p48
    $region35: #{tpu_custom_call.1} parent=1 // pred_check_branch
      %124 = sbr.rel (%p122) target = $region37
    $region36: #{tpu_custom_call.1} parent=1 // pred_region
      %v125 = vld [vmem:[#allocation2] sm:$0xff]
      %v126 = vld [vmem:[%s2] sm:$0x1]
      %v128 = vlaneseq
      %v129 = vshrl.u32 %v128, 7
      %v130 = vsub.s32 0, %v129
      %v131 = vrot.slane %v126, %v130
      %v133 = vadd.f32 %v125, %v131
      %v134 = vmax.f32 %v133, 0.0
      %v135 = vrot.slane %v134, 4
      %v136 = vadd.f32 %v134, %v135
      %v137 = vrot.slane %v136, 2
      %v138 = vadd.f32 %v136, %v137
      %v139 = vrot.slane %v138, 1
      %v140 = vadd.f32 %v138, %v139
      %v141 = vmul.f32 %v134, %v134
      %v142 = vrot.slane %v141, 4
      %v143 = vadd.f32 %v141, %v142
      %v144 = vrot.slane %v143, 2
      %v145 = vadd.f32 %v143, %v144
      %v146 = vrot.slane %v145, 1
      %v147 = vadd.f32 %v145, %v146
      %v148 = vmul.f32 %v140, 0.125
      %v149 = vmul.f32 %v147, 0.125
      %v150 = vmul.f32 %v148, %v148
      %v151 = vsub.f32 %v149, %v150
      %v152 = vmax.f32 %v151, 0.0
      %v153 = vadd.f32 %v152, 1e-05
      %v154 = vrsqrt.pop %v153
      %v155 = vld [vmem:[%s3] sm:$0x1]
      %v156 = vmul.f32 %v155, %v154
      %v157 = vld [vmem:[%s4] sm:$0x1]
      %v158 = vmul.f32 %v148, %v156
      %v159 = vsub.f32 %v157, %v158
      %v161 = vlaneseq
      %v162 = vshrl.u32 %v161, 7
      %v163 = vsub.s32 0, %v162
      %v164 = vrot.slane %v156, %v163
      %v166 = vmul.f32 %v134, %v164
      %v168 = vlaneseq
      %v169 = vshrl.u32 %v168, 7
      %v170 = vsub.s32 0, %v169
      %v171 = vrot.slane %v159, %v170
      %v173 = vadd.f32 %v166, %v171
      %174 = vst [vmem:[#allocation8] sm:$0xff] %v173
    $region37: #{tpu_custom_call.1} parent=1 // pred_fallthru
      _
    // Predicated region
    $region38: #{tpu_custom_call.1} parent=1 // pred_check
      _
    $region39: #{tpu_custom_call.1} parent=1 // pred_check_branch
      %176 = sbr.rel (0) target = $region41
    $region40: #{tpu_custom_call.1} parent=1 // pred_region
      %s178 = ssub.s32 128, 128
      %179 = vsyncadd [#allocation5], %s178
      %s181 = sshll.u32 [#allocation8], 4
      %s182 = int_to_ptr.vmem [resolvable:$true] %s181
      %184 = dma.vmem_to_hbm [thread:$0]  %s182, 128, %s5, [#allocation5]
    $region41: #{tpu_custom_call.1} parent=1 // pred_fallthru
      _
    // Predicated region
    $region42: #{tpu_custom_call.1} parent=1 // pred_check
      _
    $region43: #{tpu_custom_call.1} parent=1 // pred_check_branch
      %186 = sbr.rel (0) target = $region45
    $region44: #{tpu_custom_call.1} parent=1 // pred_region
      %187 = dma.done [#allocation5], 128
    $region45: #{tpu_custom_call.1} parent=1 // pred_fallthru
      _
    %188 = vsyncpa [#allocation4], 1
    %189 = vsyncpa [#allocation7], 1
    %190 = vsyncpa [#allocation5], 1

</llo_original>
